<compile_context>
chip_gen: v7x
topology: tpu7x:2x2x1
jax: 0.10.0
libtpu: 0.0.40
codegen_flags: <defaults>
</compile_context>

<pallas_src>
import functools

import jax
import jax.numpy as jnp
from jax.experimental import pallas as pl
from jax.experimental.pallas import tpu as pltpu


BN_EPS = 1e-5


def _round_up(v, m=128):
    return ((v + m - 1) // m) * m


def _matmul(h, w_ref):
    # bf16 x bf16 -> f32 accumulate on the MXU.
    return jnp.dot(h.astype(jnp.bfloat16), w_ref[...],
                   preferred_element_type=jnp.float32)


def _bn_relu(h, gamma_ref, beta_ref):
    # Training-mode BatchNorm1d (batch stats, biased variance) + ReLU, f32 math.
    # Single pass: sum and sum-of-squares together, var = E[h^2] - mean^2 (clamped).
    inv_b = 1.0 / h.shape[0]
    mean = jnp.sum(h, axis=0, keepdims=True) * inv_b
    mean_sq = jnp.sum(h * h, axis=0, keepdims=True) * inv_b
    var = jnp.maximum(mean_sq - mean * mean, 0.0)
    h_norm = (h - mean) * jax.lax.rsqrt(var + BN_EPS)
    return jnp.maximum(h_norm * gamma_ref[...] + beta_ref[...], 0.0)


def autoencoder_kernel(
    x_ref,
    w1_ref, g1_ref, be1_ref,      # Encoder: Linear(n, h1)  (bias cancelled by BN) + BN(h1)
    w2_ref, g2_ref, be2_ref,      # Encoder: Linear(h1, h2) (bias cancelled by BN) + BN(h2)
    w3_ref, g3_ref, be3_ref,      # Decoder: Linear(h2, h1) (bias cancelled by BN) + BN(h1)
    w4_ref, b4_ref,               # Decoder: Linear(h1, n)  (bias kept)
    out_ref,
):
    h = x_ref[...]                                   # (B, n_p) bf16
    # Encoder
    h = _bn_relu(_matmul(h, w1_ref), g1_ref, be1_ref)
    h = _bn_relu(_matmul(h, w2_ref), g2_ref, be2_ref)
    # Decoder
    h = _bn_relu(_matmul(h, w3_ref), g3_ref, be3_ref)
    out_ref[...] = _matmul(h, w4_ref) + b4_ref[...]


def init_params(key, num_features, seq_len):
    """Deterministic init mimicking PyTorch Linear defaults.

    Linear weights stored already transposed as (in, out); biases / BN params
    stored as (1, dim). All unpadded / f32 -- the wrapper pads & casts.
    """
    n = num_features * seq_len
    h1 = n // 2
    h2 = n // 8

    def linear_init(k, fan_in, fan_out):
        kw, kb = jax.random.split(k)
        bound = 1.0 / jnp.sqrt(jnp.float32(fan_in))
        w = jax.random.uniform(kw, (fan_in, fan_out), jnp.float32, -bound, bound)
        b = jax.random.uniform(kb, (1, fan_out), jnp.float32, -bound, bound)
        return w, b

    k1, k2, k3, k4 = jax.random.split(key, 4)
    w1, b1 = linear_init(k1, n, h1)
    w2, b2 = linear_init(k2, h1, h2)
    w3, b3 = linear_init(k3, h2, h1)
    w4, b4 = linear_init(k4, h1, n)

    # BatchNorm1d defaults: weight (gamma) = 1, bias (beta) = 0.
    g1, be1 = jnp.ones((1, h1), jnp.float32), jnp.zeros((1, h1), jnp.float32)
    g2, be2 = jnp.ones((1, h2), jnp.float32), jnp.zeros((1, h2), jnp.float32)
    g3, be3 = jnp.ones((1, h1), jnp.float32), jnp.zeros((1, h1), jnp.float32)

    return (w1, b1, g1, be1, w2, b2, g2, be2, w3, b3, g3, be3, w4, b4)


@functools.partial(jax.jit, static_argnames=("num_features", "seq_len"))
def autoencoder_forward(x, params, *, num_features, seq_len):
    """x: (batch, seq_len, num_features) -> (batch, seq_len, num_features)."""
    batch = x.shape[0]
    n = num_features * seq_len
    h1, h2 = n // 2, n // 8
    n_p, h1_p, h2_p = _round_up(n), _round_up(h1), _round_up(h2)

    (w1, b1, g1, be1, w2, b2, g2, be2, w3, b3, g3, be3, w4, b4) = params
    del b1, b2, b3  # exactly cancelled by training-mode BatchNorm mean subtraction

    # Flatten + zero-pad the feature axis to a lane-dense multiple of 128, cast to bf16.
    x_flat = x.reshape(batch, n).astype(jnp.float32)
    x_p = jnp.pad(x_flat, ((0, 0), (0, n_p - n))).astype(jnp.bfloat16)

    def pad_w(w, rows, cols):   # Linear weight (in, out), zero-padded, bf16 for the MXU
        return jnp.pad(w, ((0, rows - w.shape[0]), (0, cols - w.shape[1]))
                       ).astype(jnp.bfloat16)

    def pad_v(v, cols):         # (1, dim) vector, zero-padded, f32 for the epilogue
        return jnp.pad(v, ((0, 0), (0, cols - v.shape[1]))).astype(jnp.float32)

    args = (
        x_p,
        pad_w(w1, n_p, h1_p), pad_v(g1, h1_p), pad_v(be1, h1_p),
        pad_w(w2, h1_p, h2_p), pad_v(g2, h2_p), pad_v(be2, h2_p),
        pad_w(w3, h2_p, h1_p), pad_v(g3, h1_p), pad_v(be3, h1_p),
        pad_w(w4, h1_p, n_p), pad_v(b4, n_p),
    )

    vmem_spec = pl.BlockSpec(memory_space=pltpu.MemorySpace.VMEM)

    # Advisory cost estimate for XLA's scheduler.
    flops = 2 * batch * (n_p * h1_p + h1_p * h2_p + h2_p * h1_p + h1_p * n_p)
    transcendentals = 2 * h1_p + h2_p  # one rsqrt per BN feature column
    bytes_accessed = sum(a.size * a.dtype.itemsize for a in args) + batch * n_p * 4

    # Explicit VMEM budget: resident params + activations (double-buffer margin),
    # floored at 32 MiB (safe on v5e/v6e/v7x), capped well under v7x's 64 MiB physical.
    param_bytes = sum(a.size * a.dtype.itemsize for a in args)
    act_bytes = batch * (2 * n_p + 2 * h1_p + h2_p) * 4
    vmem_needed = 2 * param_bytes + 4 * act_bytes + (1 << 20)
    vmem_limit = max(32 * 1024 * 1024, min(vmem_needed, 48 * 1024 * 1024))

    out_p = pl.pallas_call(
        autoencoder_kernel,
        out_shape=jax.ShapeDtypeStruct((batch, n_p), jnp.float32),
        in_specs=[vmem_spec] * len(args),
        out_specs=vmem_spec,
        compiler_params=pltpu.CompilerParams(vmem_limit_bytes=vmem_limit),
        cost_estimate=pl.CostEstimate(
            flops=flops,
            transcendentals=transcendentals,
            bytes_accessed=bytes_accessed,
        ),
    )(*args)

    # Drop feature padding; matches PyTorch: x.reshape(batch, seq_len, -1)
    return out_p[:, :n].reshape(batch, seq_len, num_features)


if __name__ == "__main__":
    num_features = 4
    seq_len = 16
    batch = 8  # BatchNorm (training mode) needs batch > 1

    key = jax.random.PRNGKey(0)
    key_x, key_p = jax.random.split(key)
    x = jax.random.normal(key_x, (batch, seq_len, num_features), jnp.float32)
    params = init_params(key_p, num_features, seq_len)

    out = autoencoder_forward(x, params, num_features=num_features, seq_len=seq_len)
    out = jax.block_until_ready(out)

    assert out.shape == (batch, seq_len, num_features), out.shape
    assert jnp.all(jnp.isfinite(out))
    print("KERNEL_OK")
</pallas_src>

<mosaic_0001>
module attributes {stable_mosaic.version = 11 : i64} {
  func.func @autoencoder_kernel(%arg0: memref<8x128xbf16, #tpu.memory_space<vmem>>, %arg1: memref<128x128xbf16, #tpu.memory_space<vmem>>, %arg2: memref<1x128xf32, #tpu.memory_space<vmem>>, %arg3: memref<1x128xf32, #tpu.memory_space<vmem>>, %arg4: memref<128x128xbf16, #tpu.memory_space<vmem>>, %arg5: memref<1x128xf32, #tpu.memory_space<vmem>>, %arg6: memref<1x128xf32, #tpu.memory_space<vmem>>, %arg7: memref<128x128xbf16, #tpu.memory_space<vmem>>, %arg8: memref<1x128xf32, #tpu.memory_space<vmem>>, %arg9: memref<1x128xf32, #tpu.memory_space<vmem>>, %arg10: memref<128x128xbf16, #tpu.memory_space<vmem>>, %arg11: memref<1x128xf32, #tpu.memory_space<vmem>>, %arg12: memref<8x128xf32, #tpu.memory_space<vmem>>) attributes {dimension_semantics = [], scalar_prefetch = 0 : i64, scratch_operands = 0 : i64, tpu.core_type = #tpu.core_type<tc>} {
    %c0 = arith.constant 0 : index
    %c0_0 = arith.constant 0 : index
    %0 = vector.load %arg0[%c0, %c0_0] : memref<8x128xbf16, #tpu.memory_space<vmem>>, vector<8x128xbf16>
    %c0_1 = arith.constant 0 : index
    %c0_2 = arith.constant 0 : index
    %1 = vector.load %arg1[%c0_1, %c0_2] : memref<128x128xbf16, #tpu.memory_space<vmem>>, vector<128x128xbf16>
    %cst = arith.constant dense<0.000000e+00> : vector<8x128xf32>
    %2 = tpu.matmul %0, %1, %cst {dimension_numbers = #tpu.dot_dimension_numbers<[1], [0], [0], [1], [0, 0, 1, 1], [], []>} : vector<8x128xbf16>, vector<128x128xbf16>, vector<8x128xf32> -> vector<8x128xf32>
    %cst_3 = arith.constant dense<0.000000e+00> : vector<128xf32>
    %3 = vector.multi_reduction <add>, %2, %cst_3 [0] : vector<8x128xf32> to vector<128xf32>
    %4 = vector.shape_cast %3 : vector<128xf32> to vector<1x128xf32>
    %cst_4 = arith.constant 1.250000e-01 : f32
    %5 = vector.broadcast %cst_4 : f32 to vector<1x128xf32>
    %6 = arith.mulf %4, %5 : vector<1x128xf32>
    %7 = arith.mulf %2, %2 : vector<8x128xf32>
    %cst_5 = arith.constant dense<0.000000e+00> : vector<128xf32>
    %8 = vector.multi_reduction <add>, %7, %cst_5 [0] : vector<8x128xf32> to vector<128xf32>
    %9 = vector.shape_cast %8 : vector<128xf32> to vector<1x128xf32>
    %cst_6 = arith.constant 1.250000e-01 : f32
    %10 = vector.broadcast %cst_6 : f32 to vector<1x128xf32>
    %11 = arith.mulf %9, %10 : vector<1x128xf32>
    %12 = arith.mulf %6, %6 : vector<1x128xf32>
    %13 = arith.subf %11, %12 : vector<1x128xf32>
    %cst_7 = arith.constant 0.000000e+00 : f32
    %14 = vector.broadcast %cst_7 : f32 to vector<1x128xf32>
    %15 = arith.maximumf %13, %14 : vector<1x128xf32>
    %16 = vector.broadcast %6 : vector<1x128xf32> to vector<8x128xf32>
    %17 = arith.subf %2, %16 : vector<8x128xf32>
    %cst_8 = arith.constant 9.99999974E-6 : f32
    %18 = vector.broadcast %cst_8 : f32 to vector<1x128xf32>
    %19 = arith.addf %15, %18 : vector<1x128xf32>
    %20 = math.rsqrt %19 : vector<1x128xf32>
    %21 = vector.broadcast %20 : vector<1x128xf32> to vector<8x128xf32>
    %22 = arith.mulf %17, %21 : vector<8x128xf32>
    %c0_9 = arith.constant 0 : index
    %c0_10 = arith.constant 0 : index
    %23 = vector.load %arg2[%c0_9, %c0_10] : memref<1x128xf32, #tpu.memory_space<vmem>>, vector<1x128xf32>
    %24 = vector.broadcast %23 : vector<1x128xf32> to vector<8x128xf32>
    %25 = arith.mulf %22, %24 : vector<8x128xf32>
    %c0_11 = arith.constant 0 : index
    %c0_12 = arith.constant 0 : index
    %26 = vector.load %arg3[%c0_11, %c0_12] : memref<1x128xf32, #tpu.memory_space<vmem>>, vector<1x128xf32>
    %27 = vector.broadcast %26 : vector<1x128xf32> to vector<8x128xf32>
    %28 = arith.addf %25, %27 : vector<8x128xf32>
    %cst_13 = arith.constant 0.000000e+00 : f32
    %29 = vector.broadcast %cst_13 : f32 to vector<8x128xf32>
    %30 = arith.maximumf %28, %29 : vector<8x128xf32>
    %31 = arith.truncf %30 : vector<8x128xf32> to vector<8x128xbf16>
    %c0_14 = arith.constant 0 : index
    %c0_15 = arith.constant 0 : index
    %32 = vector.load %arg4[%c0_14, %c0_15] : memref<128x128xbf16, #tpu.memory_space<vmem>>, vector<128x128xbf16>
    %cst_16 = arith.constant dense<0.000000e+00> : vector<8x128xf32>
    %33 = tpu.matmul %31, %32, %cst_16 {dimension_numbers = #tpu.dot_dimension_numbers<[1], [0], [0], [1], [0, 0, 1, 1], [], []>} : vector<8x128xbf16>, vector<128x128xbf16>, vector<8x128xf32> -> vector<8x128xf32>
    %cst_17 = arith.constant dense<0.000000e+00> : vector<128xf32>
    %34 = vector.multi_reduction <add>, %33, %cst_17 [0] : vector<8x128xf32> to vector<128xf32>
    %35 = vector.shape_cast %34 : vector<128xf32> to vector<1x128xf32>
    %cst_18 = arith.constant 1.250000e-01 : f32
    %36 = vector.broadcast %cst_18 : f32 to vector<1x128xf32>
    %37 = arith.mulf %35, %36 : vector<1x128xf32>
    %38 = arith.mulf %33, %33 : vector<8x128xf32>
    %cst_19 = arith.constant dense<0.000000e+00> : vector<128xf32>
    %39 = vector.multi_reduction <add>, %38, %cst_19 [0] : vector<8x128xf32> to vector<128xf32>
    %40 = vector.shape_cast %39 : vector<128xf32> to vector<1x128xf32>
    %cst_20 = arith.constant 1.250000e-01 : f32
    %41 = vector.broadcast %cst_20 : f32 to vector<1x128xf32>
    %42 = arith.mulf %40, %41 : vector<1x128xf32>
    %43 = arith.mulf %37, %37 : vector<1x128xf32>
    %44 = arith.subf %42, %43 : vector<1x128xf32>
    %cst_21 = arith.constant 0.000000e+00 : f32
    %45 = vector.broadcast %cst_21 : f32 to vector<1x128xf32>
    %46 = arith.maximumf %44, %45 : vector<1x128xf32>
    %47 = vector.broadcast %37 : vector<1x128xf32> to vector<8x128xf32>
    %48 = arith.subf %33, %47 : vector<8x128xf32>
    %cst_22 = arith.constant 9.99999974E-6 : f32
    %49 = vector.broadcast %cst_22 : f32 to vector<1x128xf32>
    %50 = arith.addf %46, %49 : vector<1x128xf32>
    %51 = math.rsqrt %50 : vector<1x128xf32>
    %52 = vector.broadcast %51 : vector<1x128xf32> to vector<8x128xf32>
    %53 = arith.mulf %48, %52 : vector<8x128xf32>
    %c0_23 = arith.constant 0 : index
    %c0_24 = arith.constant 0 : index
    %54 = vector.load %arg5[%c0_23, %c0_24] : memref<1x128xf32, #tpu.memory_space<vmem>>, vector<1x128xf32>
    %55 = vector.broadcast %54 : vector<1x128xf32> to vector<8x128xf32>
    %56 = arith.mulf %53, %55 : vector<8x128xf32>
    %c0_25 = arith.constant 0 : index
    %c0_26 = arith.constant 0 : index
    %57 = vector.load %arg6[%c0_25, %c0_26] : memref<1x128xf32, #tpu.memory_space<vmem>>, vector<1x128xf32>
    %58 = vector.broadcast %57 : vector<1x128xf32> to vector<8x128xf32>
    %59 = arith.addf %56, %58 : vector<8x128xf32>
    %cst_27 = arith.constant 0.000000e+00 : f32
    %60 = vector.broadcast %cst_27 : f32 to vector<8x128xf32>
    %61 = arith.maximumf %59, %60 : vector<8x128xf32>
    %62 = arith.truncf %61 : vector<8x128xf32> to vector<8x128xbf16>
    %c0_28 = arith.constant 0 : index
    %c0_29 = arith.constant 0 : index
    %63 = vector.load %arg7[%c0_28, %c0_29] : memref<128x128xbf16, #tpu.memory_space<vmem>>, vector<128x128xbf16>
    %cst_30 = arith.constant dense<0.000000e+00> : vector<8x128xf32>
    %64 = tpu.matmul %62, %63, %cst_30 {dimension_numbers = #tpu.dot_dimension_numbers<[1], [0], [0], [1], [0, 0, 1, 1], [], []>} : vector<8x128xbf16>, vector<128x128xbf16>, vector<8x128xf32> -> vector<8x128xf32>
    %cst_31 = arith.constant dense<0.000000e+00> : vector<128xf32>
    %65 = vector.multi_reduction <add>, %64, %cst_31 [0] : vector<8x128xf32> to vector<128xf32>
    %66 = vector.shape_cast %65 : vector<128xf32> to vector<1x128xf32>
    %cst_32 = arith.constant 1.250000e-01 : f32
    %67 = vector.broadcast %cst_32 : f32 to vector<1x128xf32>
    %68 = arith.mulf %66, %67 : vector<1x128xf32>
    %69 = arith.mulf %64, %64 : vector<8x128xf32>
    %cst_33 = arith.constant dense<0.000000e+00> : vector<128xf32>
    %70 = vector.multi_reduction <add>, %69, %cst_33 [0] : vector<8x128xf32> to vector<128xf32>
    %71 = vector.shape_cast %70 : vector<128xf32> to vector<1x128xf32>
    %cst_34 = arith.constant 1.250000e-01 : f32
    %72 = vector.broadcast %cst_34 : f32 to vector<1x128xf32>
    %73 = arith.mulf %71, %72 : vector<1x128xf32>
    %74 = arith.mulf %68, %68 : vector<1x128xf32>
    %75 = arith.subf %73, %74 : vector<1x128xf32>
    %cst_35 = arith.constant 0.000000e+00 : f32
    %76 = vector.broadcast %cst_35 : f32 to vector<1x128xf32>
    %77 = arith.maximumf %75, %76 : vector<1x128xf32>
    %78 = vector.broadcast %68 : vector<1x128xf32> to vector<8x128xf32>
    %79 = arith.subf %64, %78 : vector<8x128xf32>
    %cst_36 = arith.constant 9.99999974E-6 : f32
    %80 = vector.broadcast %cst_36 : f32 to vector<1x128xf32>
    %81 = arith.addf %77, %80 : vector<1x128xf32>
    %82 = math.rsqrt %81 : vector<1x128xf32>
    %83 = vector.broadcast %82 : vector<1x128xf32> to vector<8x128xf32>
    %84 = arith.mulf %79, %83 : vector<8x128xf32>
    %c0_37 = arith.constant 0 : index
    %c0_38 = arith.constant 0 : index
    %85 = vector.load %arg8[%c0_37, %c0_38] : memref<1x128xf32, #tpu.memory_space<vmem>>, vector<1x128xf32>
    %86 = vector.broadcast %85 : vector<1x128xf32> to vector<8x128xf32>
    %87 = arith.mulf %84, %86 : vector<8x128xf32>
    %c0_39 = arith.constant 0 : index
    %c0_40 = arith.constant 0 : index
    %88 = vector.load %arg9[%c0_39, %c0_40] : memref<1x128xf32, #tpu.memory_space<vmem>>, vector<1x128xf32>
    %89 = vector.broadcast %88 : vector<1x128xf32> to vector<8x128xf32>
    %90 = arith.addf %87, %89 : vector<8x128xf32>
    %cst_41 = arith.constant 0.000000e+00 : f32
    %91 = vector.broadcast %cst_41 : f32 to vector<8x128xf32>
    %92 = arith.maximumf %90, %91 : vector<8x128xf32>
    %93 = arith.truncf %92 : vector<8x128xf32> to vector<8x128xbf16>
    %c0_42 = arith.constant 0 : index
    %c0_43 = arith.constant 0 : index
    %94 = vector.load %arg10[%c0_42, %c0_43] : memref<128x128xbf16, #tpu.memory_space<vmem>>, vector<128x128xbf16>
    %cst_44 = arith.constant dense<0.000000e+00> : vector<8x128xf32>
    %95 = tpu.matmul %93, %94, %cst_44 {dimension_numbers = #tpu.dot_dimension_numbers<[1], [0], [0], [1], [0, 0, 1, 1], [], []>} : vector<8x128xbf16>, vector<128x128xbf16>, vector<8x128xf32> -> vector<8x128xf32>
    %c0_45 = arith.constant 0 : index
    %c0_46 = arith.constant 0 : index
    %96 = vector.load %arg11[%c0_45, %c0_46] : memref<1x128xf32, #tpu.memory_space<vmem>>, vector<1x128xf32>
    %97 = vector.broadcast %96 : vector<1x128xf32> to vector<8x128xf32>
    %98 = arith.addf %95, %97 : vector<8x128xf32>
    %c0_47 = arith.constant 0 : index
    %c0_48 = arith.constant 0 : index
    %99 = vector.load %arg12[%c0_47, %c0_48] : memref<8x128xf32, #tpu.memory_space<vmem>>, vector<8x128xf32>
    tpu.vector_store %arg12[%c0_47, %c0_48], %98 {strides = array<i32>} : memref<8x128xf32, #tpu.memory_space<vmem>>, vector<8x128xf32>,
    return
  }
}

</mosaic_0001>

<llo_original>
// kernel: autoencoder_forward.1
$region0: #{autoencoder_forward.1}
  #allocation0 [shape = 'u32[]', space=smem, size = 0x4, offset = 0x4, fixed_abs, tag = 'smem constant byte address 0x4 - core index']
  #allocation1 [shape = 'u32[144,128]{1,0:T(1,128)}', space=vmem, size = 0x12000, scoped, tag = 'internal scratch']
  %s0 = inlined_call_operand.vmem [shape: bf16[8,128], index: 0, kind: input, shape index: {}]
  %s1 = inlined_call_operand.vmem [shape: bf16[128,128], index: 1, kind: input, shape index: {}]
  %s2 = inlined_call_operand.vmem [shape: f32[1,128], index: 2, kind: input, shape index: {}]
  %s3 = inlined_call_operand.vmem [shape: f32[1,128], index: 3, kind: input, shape index: {}]
  %s4 = inlined_call_operand.vmem [shape: bf16[128,128], index: 4, kind: input, shape index: {}]
  %s5 = inlined_call_operand.vmem [shape: f32[1,128], index: 5, kind: input, shape index: {}]
  %s6 = inlined_call_operand.vmem [shape: f32[1,128], index: 6, kind: input, shape index: {}]
  %s7 = inlined_call_operand.vmem [shape: bf16[128,128], index: 7, kind: input, shape index: {}]
  %s8 = inlined_call_operand.vmem [shape: f32[1,128], index: 8, kind: input, shape index: {}]
  %s9 = inlined_call_operand.vmem [shape: f32[1,128], index: 9, kind: input, shape index: {}]
  %s10 = inlined_call_operand.vmem [shape: bf16[128,128], index: 10, kind: input, shape index: {}]
  %s11 = inlined_call_operand.vmem [shape: f32[1,128], index: 11, kind: input, shape index: {}]
  %s12 = inlined_call_operand.vmem [shape: f32[8,128], index: 12, kind: output, shape index: {}]
  %s13 = sld [smem:[#allocation0]]
  $region58: #{autoencoder_forward.1} parent=0
    _
  %s15 = ssub.s32 1, %s13
  %s16 = scalar_select 0, %s15, %s13
  // Predicated region
  $region2: #{autoencoder_forward.1} parent=0 // pred_check
    _
  $region3: #{autoencoder_forward.1} parent=0 // pred_check_branch
    %18 = sbr.rel (0) target = $region5
  $region4: #{autoencoder_forward.1} parent=0 // pred_region
    _
  $region5: #{autoencoder_forward.1} parent=0 // pred_fallthru
    _
  // Predicated region
  $region6: #{autoencoder_forward.1} parent=0 // pred_check
    _
  $region7: #{autoencoder_forward.1} parent=0 // pred_check_branch
    %20 = sbr.rel (0) target = $region9
  $region8: #{autoencoder_forward.1} parent=0 // pred_region
    _
  $region9: #{autoencoder_forward.1} parent=0 // pred_fallthru
    _
  // Predicated region
  $region10: #{autoencoder_forward.1} parent=0 // pred_check
    _
  $region11: #{autoencoder_forward.1} parent=0 // pred_check_branch
    %22 = sbr.rel (0) target = $region13
  $region12: #{autoencoder_forward.1} parent=0 // pred_region
    _
  $region13: #{autoencoder_forward.1} parent=0 // pred_fallthru
    _
  // Predicated region
  $region14: #{autoencoder_forward.1} parent=0 // pred_check
    _
  $region15: #{autoencoder_forward.1} parent=0 // pred_check_branch
    %24 = sbr.rel (0) target = $region17
  $region16: #{autoencoder_forward.1} parent=0 // pred_region
    _
  $region17: #{autoencoder_forward.1} parent=0 // pred_fallthru
    _
  // Predicated region
  $region18: #{autoencoder_forward.1} parent=0 // pred_check
    _
  $region19: #{autoencoder_forward.1} parent=0 // pred_check_branch
    %26 = sbr.rel (0) target = $region21
  $region20: #{autoencoder_forward.1} parent=0 // pred_region
    _
  $region21: #{autoencoder_forward.1} parent=0 // pred_fallthru
    _
  // Predicated region
  $region22: #{autoencoder_forward.1} parent=0 // pred_check
    _
  $region23: #{autoencoder_forward.1} parent=0 // pred_check_branch
    %28 = sbr.rel (0) target = $region25
  $region24: #{autoencoder_forward.1} parent=0 // pred_region
    _
  $region25: #{autoencoder_forward.1} parent=0 // pred_fallthru
    _
  // Predicated region
  $region26: #{autoencoder_forward.1} parent=0 // pred_check
    _
  $region27: #{autoencoder_forward.1} parent=0 // pred_check_branch
    %30 = sbr.rel (0) target = $region29
  $region28: #{autoencoder_forward.1} parent=0 // pred_region
    _
  $region29: #{autoencoder_forward.1} parent=0 // pred_fallthru
    _
  // Predicated region
  $region30: #{autoencoder_forward.1} parent=0 // pred_check
    _
  $region31: #{autoencoder_forward.1} parent=0 // pred_check_branch
    %32 = sbr.rel (0) target = $region33
  $region32: #{autoencoder_forward.1} parent=0 // pred_region
    _
  $region33: #{autoencoder_forward.1} parent=0 // pred_fallthru
    _
  // Predicated region
  $region34: #{autoencoder_forward.1} parent=0 // pred_check
    _
  $region35: #{autoencoder_forward.1} parent=0 // pred_check_branch
    %34 = sbr.rel (0) target = $region37
  $region36: #{autoencoder_forward.1} parent=0 // pred_region
    _
  $region37: #{autoencoder_forward.1} parent=0 // pred_fallthru
    _
  // Predicated region
  $region38: #{autoencoder_forward.1} parent=0 // pred_check
    _
  $region39: #{autoencoder_forward.1} parent=0 // pred_check_branch
    %36 = sbr.rel (0) target = $region41
  $region40: #{autoencoder_forward.1} parent=0 // pred_region
    _
  $region41: #{autoencoder_forward.1} parent=0 // pred_fallthru
    _
  // Predicated region
  $region42: #{autoencoder_forward.1} parent=0 // pred_check
    _
  $region43: #{autoencoder_forward.1} parent=0 // pred_check_branch
    %38 = sbr.rel (0) target = $region45
  $region44: #{autoencoder_forward.1} parent=0 // pred_region
    _
  $region45: #{autoencoder_forward.1} parent=0 // pred_fallthru
    _
  // Predicated region
  $region46: #{autoencoder_forward.1} parent=0 // pred_check
    _
  $region47: #{autoencoder_forward.1} parent=0 // pred_check_branch
    %40 = sbr.rel (0) target = $region49
  $region48: #{autoencoder_forward.1} parent=0 // pred_region
    _
  $region49: #{autoencoder_forward.1} parent=0 // pred_fallthru
    _
  %v42 = vld [vmem:[%s0] sm:$0xf]
  %v43 = vld [vmem:[%s1] sm:$0xf]
  %v44 = vld [vmem:[%s1 + $0x4] sm:$0xf]
  %v45 = vld [vmem:[%s1 + $0x8] sm:$0xf]
  %v46 = vld [vmem:[%s1 + $0xc] sm:$0xf]
  %v47 = vld [vmem:[%s1 + $0x10] sm:$0xf]
  %v48 = vld [vmem:[%s1 + $0x14] sm:$0xf]
  %v49 = vld [vmem:[%s1 + $0x18] sm:$0xf]
  %v50 = vld [vmem:[%s1 + $0x1c] sm:$0xf]
  %v51 = vld [vmem:[%s1 + $0x20] sm:$0xf]
  %v52 = vld [vmem:[%s1 + $0x24] sm:$0xf]
  %v53 = vld [vmem:[%s1 + $0x28] sm:$0xf]
  %v54 = vld [vmem:[%s1 + $0x2c] sm:$0xf]
  %v55 = vld [vmem:[%s1 + $0x30] sm:$0xf]
  %v56 = vld [vmem:[%s1 + $0x34] sm:$0xf]
  %v57 = vld [vmem:[%s1 + $0x38] sm:$0xf]
  %v58 = vld [vmem:[%s1 + $0x3c] sm:$0xf]
  %v75 = vunpack.c.l.b16 %v43
  %v76 = vunpack.c.l.b16 %v44
  %v77 = vunpack.c.l.b16 %v45
  %v78 = vunpack.c.l.b16 %v46
  %v79 = vunpack.c.l.b16 %v47
  %v80 = vunpack.c.l.b16 %v48
  %v81 = vunpack.c.l.b16 %v49
  %v82 = vunpack.c.l.b16 %v50
  %v83 = vunpack.c.l.b16 %v51
  %v84 = vunpack.c.l.b16 %v52
  %v85 = vunpack.c.l.b16 %v53
  %v86 = vunpack.c.l.b16 %v54
  %v87 = vunpack.c.l.b16 %v55
  %v88 = vunpack.c.l.b16 %v56
  %v89 = vunpack.c.l.b16 %v57
  %v90 = vunpack.c.l.b16 %v58
  %v91 = vpack.c.b16 %v76, %v75
  %v92 = vpack.c.b16 %v78, %v77
  %v93 = vpack.c.b16 %v80, %v79
  %v94 = vpack.c.b16 %v82, %v81
  %v95 = vpack.c.b16 %v84, %v83
  %v96 = vpack.c.b16 %v86, %v85
  %v97 = vpack.c.b16 %v88, %v87
  %v98 = vpack.c.b16 %v90, %v89
  %107 = vmatprep.subr.bf16.mxu0 0
  %108 = vmatpush1.bf16.msra.mxu0 %v91
  %109 = vmatprep.subr.bf16.mxu0 0
  %110 = vmatpush1.bf16.msra.mxu0 %v92
  %111 = vmatprep.subr.bf16.mxu0 0
  %112 = vmatpush1.bf16.msra.mxu0 %v93
  %113 = vmatprep.subr.bf16.mxu0 0
  %114 = vmatpush1.bf16.msra.mxu0 %v94
  %115 = vmatprep.subr.bf16.mxu0 0
  %116 = vmatpush1.bf16.msra.mxu0 %v95
  %117 = vmatprep.subr.bf16.mxu0 0
  %118 = vmatpush1.bf16.msra.mxu0 %v96
  %119 = vmatprep.subr.bf16.mxu0 0
  %120 = vmatpush1.bf16.msra.mxu0 %v97
  %121 = vmatprep.subr.bf16.mxu0 0
  %122 = vmatpush1.bf16.msra.mxu0 %v98
  %123 = vmatprep.subr.bf16.mxu0 0
  %124 = vmatpush1.bf16.msra.mxu0 0
  %125 = vmatprep.subr.bf16.mxu0 0
  %126 = vmatpush1.bf16.msra.mxu0 0
  %127 = vmatprep.subr.bf16.mxu0 0
  %128 = vmatpush1.bf16.msra.mxu0 0
  %129 = vmatprep.subr.bf16.mxu0 0
  %130 = vmatpush1.bf16.msra.mxu0 0
  %131 = vmatprep.subr.bf16.mxu0 0
  %132 = vmatpush1.bf16.msra.mxu0 0
  %133 = vmatprep.subr.bf16.mxu0 0
  %134 = vmatpush1.bf16.msra.mxu0 0
  %135 = vmatprep.subr.bf16.mxu0 0
  %136 = vmatpush1.bf16.msra.mxu0 0
  %137 = vmatprep.subr.bf16.mxu0 0
  %138 = vmatpush1.bf16.msra.mxu0 0
  %139 = vmatprep.mubr.bf16.mxu0 0
  %140 = vmatmul.mubr.bf16.gmra.mrb[0].mxu0 %v42
  %v141 = vpop.f32.mrb[0].mxu0
  %v142 = vadd.f32 0.0, %v141
  %v143 = vpop.f32.mrb[0].mxu0
  %v144 = vpop.f32.mrb[0].mxu0
  %v145 = vpop.f32.mrb[0].mxu0
  %146 = vdwg.mxu0
  %v147 = vrot.slane %v142, 4
  %v148 = vadd.f32 %v142, %v147
  %v149 = vrot.slane %v148, 2
  %v150 = vadd.f32 %v148, %v149
  %v151 = vrot.slane %v150, 1
  %v152 = vadd.f32 %v150, %v151
  %v153 = vmul.f32 %v152, 0.125
  %v154 = vmul.f32 %v142, %v142
  %v155 = vrot.slane %v154, 4
  %v156 = vadd.f32 %v154, %v155
  %v157 = vrot.slane %v156, 2
  %v158 = vadd.f32 %v156, %v157
  %v159 = vrot.slane %v158, 1
  %v160 = vadd.f32 %v158, %v159
  %v161 = vmul.f32 %v160, 0.125
  %v162 = vmul.f32 %v153, %v153
  %v163 = vsub.f32 %v161, %v162
  %v164 = vmax.f32 %v163, 0.0
  %v165 = vsub.f32 %v142, %v153
  %v166 = vadd.f32 %v164, 1e-05
  %v167 = vrsqrt.pop %v166
  %v168 = vmul.f32 %v165, %v167
  %v169 = vld [vmem:[%s2] sm:$0x1]
  %v171 = vlaneseq
  %v172 = vshrl.u32 %v171, 7
  %v173 = vsub.s32 0, %v172
  %v174 = vrot.slane %v169, %v173
  %v176 = vmul.f32 %v168, %v174
  %v177 = vld [vmem:[%s3] sm:$0x1]
  %v179 = vlaneseq
  %v180 = vshrl.u32 %v179, 7
  %v181 = vsub.s32 0, %v180
  %v182 = vrot.slane %v177, %v181
  %v184 = vadd.f32 %v176, %v182
  %v185 = vmax.f32 %v184, 0.0
  %v186 = vpack.c.bf16 %v185, %v185
  %v187 = vld [vmem:[%s4] sm:$0xf]
  %v188 = vld [vmem:[%s4 + $0x4] sm:$0xf]
  %v189 = vld [vmem:[%s4 + $0x8] sm:$0xf]
  %v190 = vld [vmem:[%s4 + $0xc] sm:$0xf]
  %v191 = vld [vmem:[%s4 + $0x10] sm:$0xf]
  %v192 = vld [vmem:[%s4 + $0x14] sm:$0xf]
  %v193 = vld [vmem:[%s4 + $0x18] sm:$0xf]
  %v194 = vld [vmem:[%s4 + $0x1c] sm:$0xf]
  %v195 = vld [vmem:[%s4 + $0x20] sm:$0xf]
  %v196 = vld [vmem:[%s4 + $0x24] sm:$0xf]
  %v197 = vld [vmem:[%s4 + $0x28] sm:$0xf]
  %v198 = vld [vmem:[%s4 + $0x2c] sm:$0xf]
  %v199 = vld [vmem:[%s4 + $0x30] sm:$0xf]
  %v200 = vld [vmem:[%s4 + $0x34] sm:$0xf]
  %v201 = vld [vmem:[%s4 + $0x38] sm:$0xf]
  %v202 = vld [vmem:[%s4 + $0x3c] sm:$0xf]
  %v219 = vunpack.c.l.b16 %v187
  %v220 = vunpack.c.l.b16 %v188
  %v221 = vunpack.c.l.b16 %v189
  %v222 = vunpack.c.l.b16 %v190
  %v223 = vunpack.c.l.b16 %v191
  %v224 = vunpack.c.l.b16 %v192
  %v225 = vunpack.c.l.b16 %v193
  %v226 = vunpack.c.l.b16 %v194
  %v227 = vunpack.c.l.b16 %v195
  %v228 = vunpack.c.l.b16 %v196
  %v229 = vunpack.c.l.b16 %v197
  %v230 = vunpack.c.l.b16 %v198
  %v231 = vunpack.c.l.b16 %v199
  %v232 = vunpack.c.l.b16 %v200
  %v233 = vunpack.c.l.b16 %v201
  %v234 = vunpack.c.l.b16 %v202
  %v235 = vpack.c.b16 %v220, %v219
  %v236 = vpack.c.b16 %v222, %v221
  %v237 = vpack.c.b16 %v224, %v223
  %v238 = vpack.c.b16 %v226, %v225
  %v239 = vpack.c.b16 %v228, %v227
  %v240 = vpack.c.b16 %v230, %v229
  %v241 = vpack.c.b16 %v232, %v231
  %v242 = vpack.c.b16 %v234, %v233
  %251 = vmatprep.subr.bf16.mxu0 0
  %252 = vmatpush1.bf16.msra.mxu0 %v235
  %253 = vmatprep.subr.bf16.mxu0 0
  %254 = vmatpush1.bf16.msra.mxu0 %v236
  %255 = vmatprep.subr.bf16.mxu0 0
  %256 = vmatpush1.bf16.msra.mxu0 %v237
  %257 = vmatprep.subr.bf16.mxu0 0
  %258 = vmatpush1.bf16.msra.mxu0 %v238
  %259 = vmatprep.subr.bf16.mxu0 0
  %260 = vmatpush1.bf16.msra.mxu0 %v239
  %261 = vmatprep.subr.bf16.mxu0 0
  %262 = vmatpush1.bf16.msra.mxu0 %v240
  %263 = vmatprep.subr.bf16.mxu0 0
  %264 = vmatpush1.bf16.msra.mxu0 %v241
  %265 = vmatprep.subr.bf16.mxu0 0
  %266 = vmatpush1.bf16.msra.mxu0 %v242
  %267 = vmatprep.subr.bf16.mxu0 0
  %268 = vmatpush1.bf16.msra.mxu0 0
  %269 = vmatprep.subr.bf16.mxu0 0
  %270 = vmatpush1.bf16.msra.mxu0 0
  %271 = vmatprep.subr.bf16.mxu0 0
  %272 = vmatpush1.bf16.msra.mxu0 0
  %273 = vmatprep.subr.bf16.mxu0 0
  %274 = vmatpush1.bf16.msra.mxu0 0
  %275 = vmatprep.subr.bf16.mxu0 0
  %276 = vmatpush1.bf16.msra.mxu0 0
  %277 = vmatprep.subr.bf16.mxu0 0
  %278 = vmatpush1.bf16.msra.mxu0 0
  %279 = vmatprep.subr.bf16.mxu0 0
  %280 = vmatpush1.bf16.msra.mxu0 0
  %281 = vmatprep.subr.bf16.mxu0 0
  %282 = vmatpush1.bf16.msra.mxu0 0
  %283 = vmatprep.mubr.bf16.mxu0 0
  %284 = vmatmul.mubr.bf16.gmra.mrb[0].mxu0 %v186
  %v285 = vpop.f32.mrb[0].mxu0
  %v286 = vadd.f32 0.0, %v285
  %v287 = vpop.f32.mrb[0].mxu0
  %v288 = vpop.f32.mrb[0].mxu0
  %v289 = vpop.f32.mrb[0].mxu0
  %290 = vdwg.mxu0
  %v291 = vrot.slane %v286, 4
  %v292 = vadd.f32 %v286, %v291
  %v293 = vrot.slane %v292, 2
  %v294 = vadd.f32 %v292, %v293
  %v295 = vrot.slane %v294, 1
  %v296 = vadd.f32 %v294, %v295
  %v297 = vmul.f32 %v296, 0.125
  %v298 = vmul.f32 %v286, %v286
  %v299 = vrot.slane %v298, 4
  %v300 = vadd.f32 %v298, %v299
  %v301 = vrot.slane %v300, 2
  %v302 = vadd.f32 %v300, %v301
  %v303 = vrot.slane %v302, 1
  %v304 = vadd.f32 %v302, %v303
  %v305 = vmul.f32 %v304, 0.125
  %v306 = vmul.f32 %v297, %v297
  %v307 = vsub.f32 %v305, %v306
  %v308 = vmax.f32 %v307, 0.0
  %v309 = vsub.f32 %v286, %v297
  %v310 = vadd.f32 %v308, 1e-05
  %v311 = vrsqrt.pop %v310
  %v312 = vmul.f32 %v309, %v311
  %v313 = vld [vmem:[%s5] sm:$0x1]
  %v315 = vlaneseq
  %v316 = vshrl.u32 %v315, 7
  %v317 = vsub.s32 0, %v316
  %v318 = vrot.slane %v313, %v317
  %v320 = vmul.f32 %v312, %v318
  %v321 = vld [vmem:[%s6] sm:$0x1]
  %v323 = vlaneseq
  %v324 = vshrl.u32 %v323, 7
  %v325 = vsub.s32 0, %v324
  %v326 = vrot.slane %v321, %v325
  %v328 = vadd.f32 %v320, %v326
  %v329 = vmax.f32 %v328, 0.0
  %v330 = vpack.c.bf16 %v329, %v329
  %v331 = vld [vmem:[%s7] sm:$0xf]
  %v332 = vld [vmem:[%s7 + $0x4] sm:$0xf]
  %v333 = vld [vmem:[%s7 + $0x8] sm:$0xf]
  %v334 = vld [vmem:[%s7 + $0xc] sm:$0xf]
  %v335 = vld [vmem:[%s7 + $0x10] sm:$0xf]
  %v336 = vld [vmem:[%s7 + $0x14] sm:$0xf]
  %v337 = vld [vmem:[%s7 + $0x18] sm:$0xf]
  %v338 = vld [vmem:[%s7 + $0x1c] sm:$0xf]
  %v339 = vld [vmem:[%s7 + $0x20] sm:$0xf]
  %v340 = vld [vmem:[%s7 + $0x24] sm:$0xf]
  %v341 = vld [vmem:[%s7 + $0x28] sm:$0xf]
  %v342 = vld [vmem:[%s7 + $0x2c] sm:$0xf]
  %v343 = vld [vmem:[%s7 + $0x30] sm:$0xf]
  %v344 = vld [vmem:[%s7 + $0x34] sm:$0xf]
  %v345 = vld [vmem:[%s7 + $0x38] sm:$0xf]
  %v346 = vld [vmem:[%s7 + $0x3c] sm:$0xf]
  %v363 = vunpack.c.l.b16 %v331
  %v364 = vunpack.c.l.b16 %v332
  %v365 = vunpack.c.l.b16 %v333
  %v366 = vunpack.c.l.b16 %v334
  %v367 = vunpack.c.l.b16 %v335
  %v368 = vunpack.c.l.b16 %v336
  %v369 = vunpack.c.l.b16 %v337
  %v370 = vunpack.c.l.b16 %v338
  %v371 = vunpack.c.l.b16 %v339
  %v372 = vunpack.c.l.b16 %v340
  %v373 = vunpack.c.l.b16 %v341
  %v374 = vunpack.c.l.b16 %v342
  %v375 = vunpack.c.l.b16 %v343
  %v376 = vunpack.c.l.b16 %v344
  %v377 = vunpack.c.l.b16 %v345
  %v378 = vunpack.c.l.b16 %v346
  %v379 = vpack.c.b16 %v364, %v363
  %v380 = vpack.c.b16 %v366, %v365
  %v381 = vpack.c.b16 %v368, %v367
  %v382 = vpack.c.b16 %v370, %v369
  %v383 = vpack.c.b16 %v372, %v371
  %v384 = vpack.c.b16 %v374, %v373
  %v385 = vpack.c.b16 %v376, %v375
  %v386 = vpack.c.b16 %v378, %v377
  %395 = vmatprep.subr.bf16.mxu0 0
  %396 = vmatpush1.bf16.msra.mxu0 %v379
  %397 = vmatprep.subr.bf16.mxu0 0
  %398 = vmatpush1.bf16.msra.mxu0 %v380
  %399 = vmatprep.subr.bf16.mxu0 0
  %400 = vmatpush1.bf16.msra.mxu0 %v381
  %401 = vmatprep.subr.bf16.mxu0 0
  %402 = vmatpush1.bf16.msra.mxu0 %v382
  %403 = vmatprep.subr.bf16.mxu0 0
  %404 = vmatpush1.bf16.msra.mxu0 %v383
  %405 = vmatprep.subr.bf16.mxu0 0
  %406 = vmatpush1.bf16.msra.mxu0 %v384
  %407 = vmatprep.subr.bf16.mxu0 0
  %408 = vmatpush1.bf16.msra.mxu0 %v385
  %409 = vmatprep.subr.bf16.mxu0 0
  %410 = vmatpush1.bf16.msra.mxu0 %v386
  %411 = vmatprep.subr.bf16.mxu0 0
  %412 = vmatpush1.bf16.msra.mxu0 0
  %413 = vmatprep.subr.bf16.mxu0 0
  %414 = vmatpush1.bf16.msra.mxu0 0
  %415 = vmatprep.subr.bf16.mxu0 0
  %416 = vmatpush1.bf16.msra.mxu0 0
  %417 = vmatprep.subr.bf16.mxu0 0
  %418 = vmatpush1.bf16.msra.mxu0 0
  %419 = vmatprep.subr.bf16.mxu0 0
  %420 = vmatpush1.bf16.msra.mxu0 0
  %421 = vmatprep.subr.bf16.mxu0 0
  %422 = vmatpush1.bf16.msra.mxu0 0
  %423 = vmatprep.subr.bf16.mxu0 0
  %424 = vmatpush1.bf16.msra.mxu0 0
  %425 = vmatprep.subr.bf16.mxu0 0
  %426 = vmatpush1.bf16.msra.mxu0 0
  %427 = vmatprep.mubr.bf16.mxu0 0
  %428 = vmatmul.mubr.bf16.gmra.mrb[0].mxu0 %v330
  %v429 = vpop.f32.mrb[0].mxu0
  %v430 = vadd.f32 0.0, %v429
  %v431 = vpop.f32.mrb[0].mxu0
  %v432 = vpop.f32.mrb[0].mxu0
  %v433 = vpop.f32.mrb[0].mxu0
  %434 = vdwg.mxu0
  %v435 = vrot.slane %v430, 4
  %v436 = vadd.f32 %v430, %v435
  %v437 = vrot.slane %v436, 2
  %v438 = vadd.f32 %v436, %v437
  %v439 = vrot.slane %v438, 1
  %v440 = vadd.f32 %v438, %v439
  %v441 = vmul.f32 %v440, 0.125
  %v442 = vmul.f32 %v430, %v430
  %v443 = vrot.slane %v442, 4
  %v444 = vadd.f32 %v442, %v443
  %v445 = vrot.slane %v444, 2
  %v446 = vadd.f32 %v444, %v445
  %v447 = vrot.slane %v446, 1
  %v448 = vadd.f32 %v446, %v447
  %v449 = vmul.f32 %v448, 0.125
  %v450 = vmul.f32 %v441, %v441
  %v451 = vsub.f32 %v449, %v450
  %v452 = vmax.f32 %v451, 0.0
  %v453 = vsub.f32 %v430, %v441
  %v454 = vadd.f32 %v452, 1e-05
  %v455 = vrsqrt.pop %v454
  %v456 = vmul.f32 %v453, %v455
  %v457 = vld [vmem:[%s8] sm:$0x1]
  %v459 = vlaneseq
  %v460 = vshrl.u32 %v459, 7
  %v461 = vsub.s32 0, %v460
  %v462 = vrot.slane %v457, %v461
  %v464 = vmul.f32 %v456, %v462
  %v465 = vld [vmem:[%s9] sm:$0x1]
  %v467 = vlaneseq
  %v468 = vshrl.u32 %v467, 7
  %v469 = vsub.s32 0, %v468
  %v470 = vrot.slane %v465, %v469
  %v472 = vadd.f32 %v464, %v470
  %v473 = vmax.f32 %v472, 0.0
  %v474 = vpack.c.bf16 %v473, %v473
  %v475 = vld [vmem:[%s10] sm:$0xf]
  %v476 = vld [vmem:[%s10 + $0x4] sm:$0xf]
  %v477 = vld [vmem:[%s10 + $0x8] sm:$0xf]
  %v478 = vld [vmem:[%s10 + $0xc] sm:$0xf]
  %v479 = vld [vmem:[%s10 + $0x10] sm:$0xf]
  %v480 = vld [vmem:[%s10 + $0x14] sm:$0xf]
  %v481 = vld [vmem:[%s10 + $0x18] sm:$0xf]
  %v482 = vld [vmem:[%s10 + $0x1c] sm:$0xf]
  %v483 = vld [vmem:[%s10 + $0x20] sm:$0xf]
  %v484 = vld [vmem:[%s10 + $0x24] sm:$0xf]
  %v485 = vld [vmem:[%s10 + $0x28] sm:$0xf]
  %v486 = vld [vmem:[%s10 + $0x2c] sm:$0xf]
  %v487 = vld [vmem:[%s10 + $0x30] sm:$0xf]
  %v488 = vld [vmem:[%s10 + $0x34] sm:$0xf]
  %v489 = vld [vmem:[%s10 + $0x38] sm:$0xf]
  %v490 = vld [vmem:[%s10 + $0x3c] sm:$0xf]
  %v491 = vld [vmem:[%s11] sm:$0x1]
  %v493 = vlaneseq
  %v494 = vshrl.u32 %v493, 7
  %v495 = vsub.s32 0, %v494
  %v496 = vrot.slane %v491, %v495
  %v514 = vunpack.c.l.b16 %v475
  %v515 = vunpack.c.l.b16 %v476
  %v516 = vunpack.c.l.b16 %v477
  %v517 = vunpack.c.l.b16 %v478
  %v518 = vunpack.c.l.b16 %v479
  %v519 = vunpack.c.l.b16 %v480
  %v520 = vunpack.c.l.b16 %v481
  %v521 = vunpack.c.l.b16 %v482
  %v522 = vunpack.c.l.b16 %v483
  %v523 = vunpack.c.l.b16 %v484
  %v524 = vunpack.c.l.b16 %v485
  %v525 = vunpack.c.l.b16 %v486
  %v526 = vunpack.c.l.b16 %v487
  %v527 = vunpack.c.l.b16 %v488
  %v528 = vunpack.c.l.b16 %v489
  %v529 = vunpack.c.l.b16 %v490
  %v530 = vpack.c.b16 %v515, %v514
  %v531 = vpack.c.b16 %v517, %v516
  %v532 = vpack.c.b16 %v519, %v518
  %v533 = vpack.c.b16 %v521, %v520
  %v534 = vpack.c.b16 %v523, %v522
  %v535 = vpack.c.b16 %v525, %v524
  %v536 = vpack.c.b16 %v527, %v526
  %v537 = vpack.c.b16 %v529, %v528
  %546 = vmatprep.subr.bf16.mxu0 0
  %547 = vmatpush1.bf16.msra.mxu0 %v530
  %548 = vmatprep.subr.bf16.mxu0 0
  %549 = vmatpush1.bf16.msra.mxu0 %v531
  %550 = vmatprep.subr.bf16.mxu0 0
  %551 = vmatpush1.bf16.msra.mxu0 %v532
  %552 = vmatprep.subr.bf16.mxu0 0
  %553 = vmatpush1.bf16.msra.mxu0 %v533
  %554 = vmatprep.subr.bf16.mxu0 0
  %555 = vmatpush1.bf16.msra.mxu0 %v534
  %556 = vmatprep.subr.bf16.mxu0 0
  %557 = vmatpush1.bf16.msra.mxu0 %v535
  %558 = vmatprep.subr.bf16.mxu0 0
  %559 = vmatpush1.bf16.msra.mxu0 %v536
  %560 = vmatprep.subr.bf16.mxu0 0
  %561 = vmatpush1.bf16.msra.mxu0 %v537
  %562 = vmatprep.subr.bf16.mxu0 0
  %563 = vmatpush1.bf16.msra.mxu0 0
  %564 = vmatprep.subr.bf16.mxu0 0
  %565 = vmatpush1.bf16.msra.mxu0 0
  %566 = vmatprep.subr.bf16.mxu0 0
  %567 = vmatpush1.bf16.msra.mxu0 0
  %568 = vmatprep.subr.bf16.mxu0 0
  %569 = vmatpush1.bf16.msra.mxu0 0
  %570 = vmatprep.subr.bf16.mxu0 0
  %571 = vmatpush1.bf16.msra.mxu0 0
  %572 = vmatprep.subr.bf16.mxu0 0
  %573 = vmatpush1.bf16.msra.mxu0 0
  %574 = vmatprep.subr.bf16.mxu0 0
  %575 = vmatpush1.bf16.msra.mxu0 0
  %576 = vmatprep.subr.bf16.mxu0 0
  %577 = vmatpush1.bf16.msra.mxu0 0
  %578 = vmatprep.mubr.bf16.mxu0 0
  %579 = vmatmul.mubr.bf16.gmra.mrb[0].mxu0 %v474
  %v580 = vpop.f32.mrb[0].mxu0
  %v581 = vadd.f32 %v496, %v580
  %v582 = vpop.f32.mrb[0].mxu0
  %v583 = vpop.f32.mrb[0].mxu0
  %v584 = vpop.f32.mrb[0].mxu0
  %585 = vdwg.mxu0
  %586 = vst [vmem:[%s12] sm:$0xff] %v581
  // Predicated region
  $region50: #{autoencoder_forward.1} parent=0 // pred_check
    _
  $region51: #{autoencoder_forward.1} parent=0 // pred_check_branch
    %588 = sbr.rel (0) target = $region53
  $region52: #{autoencoder_forward.1} parent=0 // pred_region
    _
  $region53: #{autoencoder_forward.1} parent=0 // pred_fallthru
    _
  // Predicated region
  $region54: #{autoencoder_forward.1} parent=0 // pred_check
    _
  $region55: #{autoencoder_forward.1} parent=0 // pred_check_branch
    %590 = sbr.rel (0) target = $region57
  $region56: #{autoencoder_forward.1} parent=0 // pred_region
    _
  $region57: #{autoencoder_forward.1} parent=0 // pred_fallthru
    _

</llo_original>
